<compile_context>
chip_gen: v7x
topology: tpu7x:2x2x1
jax: 0.10.0
libtpu: 0.0.40
codegen_flags: <defaults>
</compile_context>

<pallas_src>
import functools

import jax
import jax.numpy as jnp
from jax.experimental import pallas as pl
from jax.experimental.pallas import tpu as pltpu


def _round_up(x, m):
    return ((x + m - 1) // m) * m


def _cdiv(a, b):
    return -(-a // b)


def _layer_norm_f32(r, gamma, beta, e_true, e_pad):
    """LayerNorm over the TRUE embedding width (padded lanes of r are zero)."""
    inv_e = 1.0 / float(e_true)
    mean = jnp.sum(r, axis=-1, keepdims=True) * inv_e
    cent = r - mean
    if e_true == e_pad:
        var = jnp.sum(cent * cent, axis=-1, keepdims=True) * inv_e
    else:
        lane = jax.lax.broadcasted_iota(jnp.int32, cent.shape, 1)
        cent_m = jnp.where(lane < e_true, cent, 0.0)
        var = jnp.sum(cent_m * cent_m, axis=-1, keepdims=True) * inv_e
    norm = cent * jax.lax.rsqrt(var + 1e-5)
    return norm * gamma.astype(jnp.float32) + beta.astype(jnp.float32)


def _ff_kernel_resident(x_ref, w1_ref, b1_ref, w2_ref, b2_ref, g_ref, b_ref,
                        o_ref, *, e_true, e_pad):
    # Full W1/W2 are VMEM-resident (constant index_map) -> one fused pass per row tile.
    x = x_ref[...]                                          # native dtype (MXU fast path)
    h = jnp.dot(x, w1_ref[...], preferred_element_type=jnp.float32)
    h = jnp.maximum(h + b1_ref[...].astype(jnp.float32), 0.0)
    y = jnp.dot(h.astype(w2_ref.dtype), w2_ref[...],
                preferred_element_type=jnp.float32)
    r = x.astype(jnp.float32) + y + b2_ref[...].astype(jnp.float32)
    o_ref[...] = _layer_norm_f32(r, g_ref[...], b_ref[...],
                                 e_true, e_pad).astype(o_ref.dtype)


def _ff_kernel_chunked(x_ref, w1_ref, b1_ref, w2_ref, b2_ref, g_ref, b_ref,
                       o_ref, acc_ref, *, e_true, e_pad):
    # Hidden dim F chunked along grid axis 1 (reduction axis, "arbitrary").
    f = pl.program_id(1)
    nf = pl.num_programs(1)

    @pl.when(f == 0)
    def _():
        acc_ref[...] = jnp.zeros_like(acc_ref)

    x = x_ref[...]
    h = jnp.dot(x, w1_ref[...], preferred_element_type=jnp.float32)
    h = jnp.maximum(h + b1_ref[...].astype(jnp.float32), 0.0)
    acc_ref[...] += jnp.dot(h.astype(w2_ref.dtype), w2_ref[...],
                            preferred_element_type=jnp.float32)

    @pl.when(f == nf - 1)
    def _():
        r = x.astype(jnp.float32) + acc_ref[...] + b2_ref[...].astype(jnp.float32)
        o_ref[...] = _layer_norm_f32(r, g_ref[...], b_ref[...],
                                     e_true, e_pad).astype(o_ref.dtype)


def _maybe_pad2(a, rows, cols):
    pr, pc = rows - a.shape[0], cols - a.shape[1]
    if pr == 0 and pc == 0:
        return a                                   # no per-call HBM copy when aligned
    return jnp.pad(a, ((0, pr), (0, pc)))


@functools.partial(jax.jit,
                   static_argnames=("block_rows", "block_ff", "force_chunk"))
def feed_forward(x, w1, b1, w2, b2, gamma, beta, *,
                 block_rows=512, block_ff=512, force_chunk=False):
    """x: (B, S, E).  w1: (E, F) (= torch Linear.weight.T), b1: (F,),
    w2: (F, E), b2: (E,), gamma/beta: (E,).  Dropout = identity (eval mode)."""
    B, S, E = x.shape
    F = w1.shape[1]
    N = B * S
    in_b = jnp.dtype(x.dtype).itemsize
    w_b = jnp.dtype(w1.dtype).itemsize
    sub = {4: 8, 2: 16, 1: 32}.get(in_b, 8)        # sublane multiple

    E_pad = _round_up(E, 128)                      # lane-dense loads/stores
    F128 = _round_up(F, 128)

    # ---- device VMEM budget (v7x: 64 MiB per TC; v5e/v6e: 128 MiB) -----------------
    try:
        vmem_cap = int(pltpu.get_tpu_info().vmem_capacity_bytes)
    except Exception:                              # conservative fallback
        vmem_cap = 64 * 1024 * 1024
    budget = int(0.85 * vmem_cap)

    # ---- row tile: large enough to amortize weight traffic, >=2 tiles for megacore --
    n_sub = _round_up(N, sub)
    tm = min(_round_up(block_rows, sub), n_sub)
    if n_sub > sub and tm >= n_sub:                # keep both v7x TensorCores busy
        tm = _round_up(_cdiv(N, 2), sub)

    # ---- path selection: weight-resident (preferred) vs F-chunked -------------------
    def resident_bytes(tm_):
        return (2 * tm_ * E_pad * in_b             # x tile (double-buffered)
                + 2 * tm_ * E_pad * in_b           # out tile (double-buffered)
                + 2 * 2 * E_pad * F128 * w_b       # W1 + W2 (counted double-buffered)
                + 2 * (F128 + 3 * E_pad) * max(w_b, 4)   # biases / gamma / beta
                + tm_ * F128 * 4                   # h intermediate (f32)
                + 2 * tm_ * E_pad * 4)             # residual / LayerNorm f32 temps

    use_resident = (not force_chunk) and resident_bytes(tm) <= budget
    if (not force_chunk) and (not use_resident):
        # Weights might still fit with a smaller row tile -> prefer residency anyway.
        tm_small = max(sub, min(tm, _round_up(256, sub)))
        if resident_bytes(tm_small) <= budget:
            tm, use_resident = tm_small, True

    if use_resident:
        F_pad = F128
        tf = None
    else:
        # Minimal F padding: F_pad exceeds F by at most nf*128 lanes.
        nf = _cdiv(F128, _round_up(min(block_ff, F128), 128))
        tf = _round_up(_cdiv(F128, nf), 128)
        F_pad = nf * tf

        def chunked_bytes(tm_, tf_):
            return (2 * tm_ * E_pad * in_b         # x tile
                    + 2 * tm_ * E_pad * in_b       # out tile
                    + 2 * 2 * tf_ * E_pad * w_b    # W1/W2 chunks, double-buffered
                    + 2 * (tf_ + 3 * E_pad) * max(w_b, 4)
                    + tm_ * E_pad * 4              # acc scratch
                    + tm_ * tf_ * 4                # h intermediate
                    + tm_ * E_pad * 4)             # epilogue temps

        while chunked_bytes(tm, tf) > budget and tm > sub:
            tm = max(sub, _round_up(tm // 2, sub))

    N_pad = _round_up(N, tm)

    # ---- pad operands only when needed (zeros keep the math exact) ------------------
    x2 = _maybe_pad2(x.reshape(N, E), N_pad, E_pad)
    w1p = _maybe_pad2(w1, E_pad, F_pad)
    b1p = _maybe_pad2(b1.reshape(1, F), 1, F_pad)
    w2p = _maybe_pad2(w2, F_pad, E_pad)
    b2p = _maybe_pad2(b2.reshape(1, E), 1, E_pad)
    gp = _maybe_pad2(gamma.reshape(1, E), 1, E_pad)
    bp = _maybe_pad2(beta.reshape(1, E), 1, E_pad)

    if use_resident:
        grid = (N_pad // tm,)
        in_specs = [
            pl.BlockSpec((tm, E_pad), lambda i: (i, 0)),       # x rows tile
            pl.BlockSpec((E_pad, F_pad), lambda i: (0, 0)),    # W1 (resident, fetched once)
            pl.BlockSpec((1, F_pad), lambda i: (0, 0)),        # b1
            pl.BlockSpec((F_pad, E_pad), lambda i: (0, 0)),    # W2 (resident, fetched once)
            pl.BlockSpec((1, E_pad), lambda i: (0, 0)),        # b2
            pl.BlockSpec((1, E_pad), lambda i: (0, 0)),        # gamma
            pl.BlockSpec((1, E_pad), lambda i: (0, 0)),        # beta
        ]
        out_specs = pl.BlockSpec((tm, E_pad), lambda i: (i, 0))
        scratch_shapes = []
        kernel = functools.partial(_ff_kernel_resident, e_true=E, e_pad=E_pad)
        dim_sem = ("parallel",)
    else:
        grid = (N_pad // tm, F_pad // tf)
        in_specs = [
            pl.BlockSpec((tm, E_pad), lambda i, f: (i, 0)),    # x rows tile
            pl.BlockSpec((E_pad, tf), lambda i, f: (0, f)),    # W1 column chunk
            pl.BlockSpec((1, tf), lambda i, f: (0, f)),        # b1 chunk
            pl.BlockSpec((tf, E_pad), lambda i, f: (f, 0)),    # W2 row chunk
            pl.BlockSpec((1, E_pad), lambda i, f: (0, 0)),     # b2
            pl.BlockSpec((1, E_pad), lambda i, f: (0, 0)),     # gamma
            pl.BlockSpec((1, E_pad), lambda i, f: (0, 0)),     # beta
        ]
        out_specs = pl.BlockSpec((tm, E_pad), lambda i, f: (i, 0))
        scratch_shapes = [pltpu.VMEM((tm, E_pad), jnp.float32)]
        kernel = functools.partial(_ff_kernel_chunked, e_true=E, e_pad=E_pad)
        dim_sem = ("parallel", "arbitrary")

    out2 = pl.pallas_call(
        kernel,
        out_shape=jax.ShapeDtypeStruct((N_pad, E_pad), x.dtype),
        grid_spec=pltpu.PrefetchScalarGridSpec(
            num_scalar_prefetch=0,
            grid=grid,
            in_specs=in_specs,
            out_specs=out_specs,
            scratch_shapes=scratch_shapes,
        ),
        compiler_params=pltpu.CompilerParams(
            dimension_semantics=dim_sem,
            vmem_limit_bytes=budget,
        ),
    )(x2, w1p, b1p, w2p, b2p, gp, bp)

    if N_pad == N and E_pad == E:
        return out2.reshape(B, S, E)
    return out2[:N, :E].reshape(B, S, E)


def _reference(x, w1, b1, w2, b2, gamma, beta):
    h = jnp.maximum(x @ w1 + b1, 0.0)
    y = h @ w2 + b2
    r = x + y
    mean = jnp.mean(r, axis=-1, keepdims=True)
    var = jnp.mean((r - mean) ** 2, axis=-1, keepdims=True)
    return (r - mean) / jnp.sqrt(var + 1e-5) * gamma + beta


def _make_params(key, E, F, dtype=jnp.float32):
    k1, kb1, k2, kb2 = jax.random.split(key, 4)
    w1 = (jax.random.normal(k1, (E, F)) * 0.05).astype(dtype)
    b1 = (jax.random.normal(kb1, (F,)) * 0.01).astype(dtype)
    w2 = (jax.random.normal(k2, (F, E)) * 0.05).astype(dtype)
    b2 = (jax.random.normal(kb2, (E,)) * 0.01).astype(dtype)
    gamma = jnp.ones((E,), dtype)
    beta = jnp.zeros((E,), dtype)
    return w1, b1, w2, b2, gamma, beta


if __name__ == "__main__":
    key = jax.random.PRNGKey(0)
    kx1, kp1, kx2, kp2 = jax.random.split(key, 4)

    # Test 1: SAINT-like small shape (batch=2, seq=8, emb_dim=32, dim_ff=64).
    # Exercises the weight-resident path with lane padding + 2 row tiles.
    B, S, E, F = 2, 8, 32, 64
    x = jax.random.normal(kx1, (B, S, E), dtype=jnp.float32)
    params = _make_params(kp1, E, F)
    out = jax.block_until_ready(feed_forward(x, *params))
    ref = _reference(x.reshape(-1, E), *params).reshape(B, S, E)
    assert out.shape == (B, S, E)
    assert jnp.allclose(out, ref, atol=1e-5, rtol=1e-5), "mismatch vs reference (test 1)"

    # Test 2: row padding + lane padding + multi row-tile grid (resident path).
    B2, S2, E2, F2 = 2, 40, 96, 192
    x2 = jax.random.normal(kx2, (B2, S2, E2), dtype=jnp.float32)
    params2 = _make_params(kp2, E2, F2)
    out2 = jax.block_until_ready(
        feed_forward(x2, *params2, block_rows=32, block_ff=128))
    ref2 = _reference(x2.reshape(-1, E2), *params2).reshape(B2, S2, E2)
    assert out2.shape == (B2, S2, E2)
    assert jnp.allclose(out2, ref2, atol=1e-4, rtol=1e-4), "mismatch vs reference (test 2)"

    # Test 3: force the F-chunked fallback path (2-D grid + f32 accumulator).
    out3 = jax.block_until_ready(
        feed_forward(x2, *params2, block_rows=32, block_ff=128, force_chunk=True))
    assert out3.shape == (B2, S2, E2)
    assert jnp.allclose(out3, ref2, atol=1e-4, rtol=1e-4), "mismatch vs reference (test 3)"

    print("KERNEL_OK")
</pallas_src>

<mosaic_0001>
module attributes {stable_mosaic.version = 11 : i64} {
  func.func @_ff_kernel_resident(%arg0: i32, %arg1: memref<8x128xf32, #tpu.memory_space<vmem>>, %arg2: memref<128x128xf32, #tpu.memory_space<vmem>>, %arg3: memref<1x128xf32, #tpu.memory_space<vmem>>, %arg4: memref<128x128xf32, #tpu.memory_space<vmem>>, %arg5: memref<1x128xf32, #tpu.memory_space<vmem>>, %arg6: memref<1x128xf32, #tpu.memory_space<vmem>>, %arg7: memref<1x128xf32, #tpu.memory_space<vmem>>, %arg8: memref<8x128xf32, #tpu.memory_space<vmem>>) attributes {dimension_semantics = [#tpu.dimension_semantics<parallel>], iteration_bounds = array<i64: 2>, scalar_prefetch = 0 : i64, scratch_operands = 0 : i64, tpu.core_type = #tpu.core_type<tc>, window_params = [{transform_indices = @transform_0, window_bounds = array<i64: 8, 128>}, {pipeline_mode = #tpu.pipeline_mode<synchronous>, transform_indices = @transform_1, window_bounds = array<i64: 128, 128>}, {pipeline_mode = #tpu.pipeline_mode<synchronous>, transform_indices = @transform_2, window_bounds = array<i64: 1, 128>}, {pipeline_mode = #tpu.pipeline_mode<synchronous>, transform_indices = @transform_3, window_bounds = array<i64: 128, 128>}, {pipeline_mode = #tpu.pipeline_mode<synchronous>, transform_indices = @transform_4, window_bounds = array<i64: 1, 128>}, {pipeline_mode = #tpu.pipeline_mode<synchronous>, transform_indices = @transform_5, window_bounds = array<i64: 1, 128>}, {pipeline_mode = #tpu.pipeline_mode<synchronous>, transform_indices = @transform_6, window_bounds = array<i64: 1, 128>}, {transform_indices = @transform_7, window_bounds = array<i64: 8, 128>}]} {
    %c0 = arith.constant 0 : index
    %c0_0 = arith.constant 0 : index
    %0 = vector.load %arg1[%c0, %c0_0] : memref<8x128xf32, #tpu.memory_space<vmem>>, vector<8x128xf32>
    %c0_1 = arith.constant 0 : index
    %c0_2 = arith.constant 0 : index
    %1 = vector.load %arg2[%c0_1, %c0_2] : memref<128x128xf32, #tpu.memory_space<vmem>>, vector<128x128xf32>
    %cst = arith.constant dense<0.000000e+00> : vector<8x128xf32>
    %2 = tpu.matmul %0, %1, %cst {dimension_numbers = #tpu.dot_dimension_numbers<[1], [0], [0], [1], [0, 0, 1, 1], [], []>} : vector<8x128xf32>, vector<128x128xf32>, vector<8x128xf32> -> vector<8x128xf32>
    %c0_3 = arith.constant 0 : index
    %c0_4 = arith.constant 0 : index
    %3 = vector.load %arg3[%c0_3, %c0_4] : memref<1x128xf32, #tpu.memory_space<vmem>>, vector<1x128xf32>
    %4 = vector.broadcast %3 : vector<1x128xf32> to vector<8x128xf32>
    %5 = arith.addf %2, %4 : vector<8x128xf32>
    %cst_5 = arith.constant 0.000000e+00 : f32
    %6 = vector.broadcast %cst_5 : f32 to vector<8x128xf32>
    %7 = arith.maximumf %5, %6 : vector<8x128xf32>
    %c0_6 = arith.constant 0 : index
    %c0_7 = arith.constant 0 : index
    %8 = vector.load %arg4[%c0_6, %c0_7] : memref<128x128xf32, #tpu.memory_space<vmem>>, vector<128x128xf32>
    %cst_8 = arith.constant dense<0.000000e+00> : vector<8x128xf32>
    %9 = tpu.matmul %7, %8, %cst_8 {dimension_numbers = #tpu.dot_dimension_numbers<[1], [0], [0], [1], [0, 0, 1, 1], [], []>} : vector<8x128xf32>, vector<128x128xf32>, vector<8x128xf32> -> vector<8x128xf32>
    %10 = arith.addf %0, %9 : vector<8x128xf32>
    %c0_9 = arith.constant 0 : index
    %c0_10 = arith.constant 0 : index
    %11 = vector.load %arg5[%c0_9, %c0_10] : memref<1x128xf32, #tpu.memory_space<vmem>>, vector<1x128xf32>
    %12 = vector.broadcast %11 : vector<1x128xf32> to vector<8x128xf32>
    %13 = arith.addf %10, %12 : vector<8x128xf32>
    %c0_11 = arith.constant 0 : index
    %c0_12 = arith.constant 0 : index
    %14 = vector.load %arg6[%c0_11, %c0_12] : memref<1x128xf32, #tpu.memory_space<vmem>>, vector<1x128xf32>
    %c0_13 = arith.constant 0 : index
    %c0_14 = arith.constant 0 : index
    %15 = vector.load %arg7[%c0_13, %c0_14] : memref<1x128xf32, #tpu.memory_space<vmem>>, vector<1x128xf32>
    %cst_15 = arith.constant dense<0.000000e+00> : vector<8xf32>
    %16 = vector.multi_reduction <add>, %13, %cst_15 [1] : vector<8x128xf32> to vector<8xf32>
    %17 = vector.shape_cast %16 : vector<8xf32> to vector<8x1xf32>
    %cst_16 = arith.constant 3.125000e-02 : f32
    %18 = vector.broadcast %cst_16 : f32 to vector<8x1xf32>
    %19 = arith.mulf %17, %18 : vector<8x1xf32>
    %20 = vector.broadcast %19 : vector<8x1xf32> to vector<8x128xf32>
    %21 = arith.subf %13, %20 : vector<8x128xf32>
    %22 = tpu.iota {dimensions = array<i32: 1>} : vector<8x128xi32>
    %c32_i32 = arith.constant 32 : i32
    %23 = vector.broadcast %c32_i32 : i32 to vector<8x128xi32>
    %24 = arith.cmpi slt, %22, %23 : vector<8x128xi32>
    %cst_17 = arith.constant 0.000000e+00 : f32
    %25 = vector.broadcast %cst_17 : f32 to vector<8x128xf32>
    %26 = arith.select %24, %21, %25 : vector<8x128xi1>, vector<8x128xf32>
    %27 = arith.mulf %26, %26 : vector<8x128xf32>
    %cst_18 = arith.constant dense<0.000000e+00> : vector<8xf32>
    %28 = vector.multi_reduction <add>, %27, %cst_18 [1] : vector<8x128xf32> to vector<8xf32>
    %29 = vector.shape_cast %28 : vector<8xf32> to vector<8x1xf32>
    %cst_19 = arith.constant 3.125000e-02 : f32
    %30 = vector.broadcast %cst_19 : f32 to vector<8x1xf32>
    %31 = arith.mulf %29, %30 : vector<8x1xf32>
    %cst_20 = arith.constant 9.99999974E-6 : f32
    %32 = vector.broadcast %cst_20 : f32 to vector<8x1xf32>
    %33 = arith.addf %31, %32 : vector<8x1xf32>
    %34 = math.rsqrt %33 : vector<8x1xf32>
    %35 = vector.broadcast %34 : vector<8x1xf32> to vector<8x128xf32>
    %36 = arith.mulf %21, %35 : vector<8x128xf32>
    %37 = vector.broadcast %14 : vector<1x128xf32> to vector<8x128xf32>
    %38 = arith.mulf %36, %37 : vector<8x128xf32>
    %39 = vector.broadcast %15 : vector<1x128xf32> to vector<8x128xf32>
    %40 = arith.addf %38, %39 : vector<8x128xf32>
    %c0_21 = arith.constant 0 : index
    %c0_22 = arith.constant 0 : index
    %41 = vector.load %arg8[%c0_21, %c0_22] : memref<8x128xf32, #tpu.memory_space<vmem>>, vector<8x128xf32>
    tpu.vector_store %arg8[%c0_21, %c0_22], %40 {strides = array<i32>} : memref<8x128xf32, #tpu.memory_space<vmem>>, vector<8x128xf32>,
    return
  }
  func.func @transform_0(%arg0: i32) -> (i32, i32) {
    %c0_i32 = arith.constant 0 : i32
    %c0_i32_0 = arith.constant 0 : i32
    return %arg0, %c0_i32 : i32, i32
  }
  func.func @transform_1(%arg0: i32) -> (i32, i32) {
    %c0_i32 = arith.constant 0 : i32
    %c0_i32_0 = arith.constant 0 : i32
    %c0_i32_1 = arith.constant 0 : i32
    return %c0_i32, %c0_i32_0 : i32, i32
  }
  func.func @transform_2(%arg0: i32) -> (i32, i32) {
    %c0_i32 = arith.constant 0 : i32
    %c0_i32_0 = arith.constant 0 : i32
    %c0_i32_1 = arith.constant 0 : i32
    return %c0_i32, %c0_i32_0 : i32, i32
  }
  func.func @transform_3(%arg0: i32) -> (i32, i32) {
    %c0_i32 = arith.constant 0 : i32
    %c0_i32_0 = arith.constant 0 : i32
    %c0_i32_1 = arith.constant 0 : i32
    return %c0_i32, %c0_i32_0 : i32, i32
  }
  func.func @transform_4(%arg0: i32) -> (i32, i32) {
    %c0_i32 = arith.constant 0 : i32
    %c0_i32_0 = arith.constant 0 : i32
    %c0_i32_1 = arith.constant 0 : i32
    return %c0_i32, %c0_i32_0 : i32, i32
  }
  func.func @transform_5(%arg0: i32) -> (i32, i32) {
    %c0_i32 = arith.constant 0 : i32
    %c0_i32_0 = arith.constant 0 : i32
    %c0_i32_1 = arith.constant 0 : i32
    return %c0_i32, %c0_i32_0 : i32, i32
  }
  func.func @transform_6(%arg0: i32) -> (i32, i32) {
    %c0_i32 = arith.constant 0 : i32
    %c0_i32_0 = arith.constant 0 : i32
    %c0_i32_1 = arith.constant 0 : i32
    return %c0_i32, %c0_i32_0 : i32, i32
  }
  func.func @transform_7(%arg0: i32) -> (i32, i32) {
    %c0_i32 = arith.constant 0 : i32
    %c0_i32_0 = arith.constant 0 : i32
    return %arg0, %c0_i32 : i32, i32
  }
}

</mosaic_0001>

<llo_original>
// kernel: feed_forward.1
$region0: #{feed_forward.1}
  #allocation0 [shape = 'u32[]', space=smem, size = 0x4, offset = 0x4, fixed_abs, tag = 'smem constant byte address 0x4 - core index']
  #allocation1 [shape = 'u32[144,128]{1,0:T(1,128)}', space=vmem, size = 0x12000, scoped, tag = 'internal scratch']
  %s0 = inlined_call_operand.vmem [shape: f32[16,128], index: 0, kind: input, shape index: {}]
  %s1 = inlined_call_operand.vmem [shape: f32[128,128], index: 1, kind: input, shape index: {}]
  %s2 = inlined_call_operand.vmem [shape: f32[1,128], index: 2, kind: input, shape index: {}]
  %s3 = inlined_call_operand.vmem [shape: f32[128,128], index: 3, kind: input, shape index: {}]
  %s4 = inlined_call_operand.vmem [shape: f32[1,128], index: 4, kind: input, shape index: {}]
  %s5 = inlined_call_operand.vmem [shape: f32[1,128], index: 5, kind: input, shape index: {}]
  %s6 = inlined_call_operand.vmem [shape: f32[1,128], index: 6, kind: input, shape index: {}]
  %s7 = inlined_call_operand.vmem [shape: f32[16,128], index: 7, kind: output, shape index: {}]
  %s8 = sld [smem:[#allocation0]]
  $region61: #{feed_forward.1} parent=0
    _
  %s10 = ssub.s32 1, %s8
  %s11 = scalar_select 0, %s10, %s8
  loop: start=0, step=1, limit=4
  $region2: #{feed_forward.1} parent=0 // loop_pre_header
    _
  $region3: #{feed_forward.1} parent=0 // loop_header
    %s13 = sphi 0, %s17
    %p14 = scmp.ge.s32.totalorder %s13, 4
    %s23 = sphi 0, %s25
    %s26 = sphi 0, %s23
    %s27 = sphi 0, %s26
    %s43 = sphi 0, %s27
    %s47 = sphi 0, %s47
    %s49 = sphi 0, %s47
    %s50 = sphi 0, %s49
    %s64 = sphi 0, %s50
    %s68 = sphi 0, %s68
    %s70 = sphi 0, %s68
    %s71 = sphi 0, %s70
    %s85 = sphi 0, %s71
    %s89 = sphi 0, %s89
    %s91 = sphi 0, %s89
    %s92 = sphi 0, %s91
    %s106 = sphi 0, %s92
    %s110 = sphi 0, %s110
    %s112 = sphi 0, %s110
    %s113 = sphi 0, %s112
    %s127 = sphi 0, %s113
    %s131 = sphi 0, %s131
    %s133 = sphi 0, %s131
    %s134 = sphi 0, %s133
    %s148 = sphi 0, %s134
    %s152 = sphi 0, %s152
    %s154 = sphi 0, %s152
    %s155 = sphi 0, %s154
    %s169 = sphi 0, %s155
    %s175 = sphi 0, %s177
    %s178 = sphi 0, %s175
    %s179 = sphi 0, %s178
    %s195 = sphi 0, %s179
  $region4: #{feed_forward.1} parent=0 // loop_header_branch
    %16 = sbr.rel (%p14) target = $region8
  $region5: #{feed_forward.1} parent=0 // loop_body
    %s18 = ssub.s32 %s13, 1
    %s19 = ssub.s32 %s13, 2
    %s20 = sadd.s32 %s13, 1
    %s21 = ssub.s32 %s13, %s20
    %p22 = scmp.eq.s32.totalorder %s21, 0
    %s24 = sadd.s32 %s23, 1
    %s25 = scalar_select %p22, %s23, %s24
    %p28 = pneg %p22
    %p29 = scmp.eq.s32.totalorder %s13, 1
    %p30 = por %p28, %p29
    %p31 = scmp.ne.s32.totalorder %s23, %s26
    %p32 = scmp.eq.s32.totalorder %s13, 0
    %p33 = por %p31, %p32
    %p34 = scmp.ne.s32.totalorder %s23, %s26
    %p35 = scmp.eq.s32.totalorder %s18, 1
    %p36 = por %p34, %p35
    %p37 = scmp.ne.s32.totalorder %s26, %s27
    %p38 = scmp.eq.s32.totalorder %s18, 0
    %p39 = por %p37, %p38
    %p40 = scmp.ne.s32.totalorder %s26, %s27
    %p41 = scmp.eq.s32.totalorder %s19, 1
    %p42 = por %p40, %p41
    %p44 = scmp.ne.s32.totalorder %s27, %s43
    %p45 = scmp.eq.s32.totalorder %s19, 0
    %p46 = por %p44, %p45
    %s48 = sadd.s32 %s47, 1
    %p51 = scmp.eq.s32.totalorder %s13, 1
    %p52 = scmp.ne.s32.totalorder %s47, %s49
    %p53 = scmp.eq.s32.totalorder %s13, 0
    %p54 = por %p52, %p53
    %p55 = scmp.ne.s32.totalorder %s47, %s49
    %p56 = scmp.eq.s32.totalorder %s18, 1
    %p57 = por %p55, %p56
    %p58 = scmp.ne.s32.totalorder %s49, %s50
    %p59 = scmp.eq.s32.totalorder %s18, 0
    %p60 = por %p58, %p59
    %p61 = scmp.ne.s32.totalorder %s49, %s50
    %p62 = scmp.eq.s32.totalorder %s19, 1
    %p63 = por %p61, %p62
    %p65 = scmp.ne.s32.totalorder %s50, %s64
    %p66 = scmp.eq.s32.totalorder %s19, 0
    %p67 = por %p65, %p66
    %s69 = sadd.s32 %s68, 1
    %p72 = scmp.eq.s32.totalorder %s13, 1
    %p73 = scmp.ne.s32.totalorder %s68, %s70
    %p74 = scmp.eq.s32.totalorder %s13, 0
    %p75 = por %p73, %p74
    %p76 = scmp.ne.s32.totalorder %s68, %s70
    %p77 = scmp.eq.s32.totalorder %s18, 1
    %p78 = por %p76, %p77
    %p79 = scmp.ne.s32.totalorder %s70, %s71
    %p80 = scmp.eq.s32.totalorder %s18, 0
    %p81 = por %p79, %p80
    %p82 = scmp.ne.s32.totalorder %s70, %s71
    %p83 = scmp.eq.s32.totalorder %s19, 1
    %p84 = por %p82, %p83
    %p86 = scmp.ne.s32.totalorder %s71, %s85
    %p87 = scmp.eq.s32.totalorder %s19, 0
    %p88 = por %p86, %p87
    %s90 = sadd.s32 %s89, 1
    %p93 = scmp.eq.s32.totalorder %s13, 1
    %p94 = scmp.ne.s32.totalorder %s89, %s91
    %p95 = scmp.eq.s32.totalorder %s13, 0
    %p96 = por %p94, %p95
    %p97 = scmp.ne.s32.totalorder %s89, %s91
    %p98 = scmp.eq.s32.totalorder %s18, 1
    %p99 = por %p97, %p98
    %p100 = scmp.ne.s32.totalorder %s91, %s92
    %p101 = scmp.eq.s32.totalorder %s18, 0
    %p102 = por %p100, %p101
    %p103 = scmp.ne.s32.totalorder %s91, %s92
    %p104 = scmp.eq.s32.totalorder %s19, 1
    %p105 = por %p103, %p104
    %p107 = scmp.ne.s32.totalorder %s92, %s106
    %p108 = scmp.eq.s32.totalorder %s19, 0
    %p109 = por %p107, %p108
    %s111 = sadd.s32 %s110, 1
    %p114 = scmp.eq.s32.totalorder %s13, 1
    %p115 = scmp.ne.s32.totalorder %s110, %s112
    %p116 = scmp.eq.s32.totalorder %s13, 0
    %p117 = por %p115, %p116
    %p118 = scmp.ne.s32.totalorder %s110, %s112
    %p119 = scmp.eq.s32.totalorder %s18, 1
    %p120 = por %p118, %p119
    %p121 = scmp.ne.s32.totalorder %s112, %s113
    %p122 = scmp.eq.s32.totalorder %s18, 0
    %p123 = por %p121, %p122
    %p124 = scmp.ne.s32.totalorder %s112, %s113
    %p125 = scmp.eq.s32.totalorder %s19, 1
    %p126 = por %p124, %p125
    %p128 = scmp.ne.s32.totalorder %s113, %s127
    %p129 = scmp.eq.s32.totalorder %s19, 0
    %p130 = por %p128, %p129
    %s132 = sadd.s32 %s131, 1
    %p135 = scmp.eq.s32.totalorder %s13, 1
    %p136 = scmp.ne.s32.totalorder %s131, %s133
    %p137 = scmp.eq.s32.totalorder %s13, 0
    %p138 = por %p136, %p137
    %p139 = scmp.ne.s32.totalorder %s131, %s133
    %p140 = scmp.eq.s32.totalorder %s18, 1
    %p141 = por %p139, %p140
    %p142 = scmp.ne.s32.totalorder %s133, %s134
    %p143 = scmp.eq.s32.totalorder %s18, 0
    %p144 = por %p142, %p143
    %p145 = scmp.ne.s32.totalorder %s133, %s134
    %p146 = scmp.eq.s32.totalorder %s19, 1
    %p147 = por %p145, %p146
    %p149 = scmp.ne.s32.totalorder %s134, %s148
    %p150 = scmp.eq.s32.totalorder %s19, 0
    %p151 = por %p149, %p150
    %s153 = sadd.s32 %s152, 1
    %p156 = scmp.eq.s32.totalorder %s13, 1
    %p157 = scmp.ne.s32.totalorder %s152, %s154
    %p158 = scmp.eq.s32.totalorder %s13, 0
    %p159 = por %p157, %p158
    %p160 = scmp.ne.s32.totalorder %s152, %s154
    %p161 = scmp.eq.s32.totalorder %s18, 1
    %p162 = por %p160, %p161
    %p163 = scmp.ne.s32.totalorder %s154, %s155
    %p164 = scmp.eq.s32.totalorder %s18, 0
    %p165 = por %p163, %p164
    %p166 = scmp.ne.s32.totalorder %s154, %s155
    %p167 = scmp.eq.s32.totalorder %s19, 1
    %p168 = por %p166, %p167
    %p170 = scmp.ne.s32.totalorder %s155, %s169
    %p171 = scmp.eq.s32.totalorder %s19, 0
    %p172 = por %p170, %p171
    %s173 = ssub.s32 %s13, %s20
    %p174 = scmp.eq.s32.totalorder %s173, 0
    %s176 = sadd.s32 %s175, 1
    %s177 = scalar_select %p174, %s175, %s176
    %p180 = pneg %p174
    %p181 = scmp.eq.s32.totalorder %s13, 1
    %p182 = por %p180, %p181
    %p183 = scmp.ne.s32.totalorder %s175, %s178
    %p184 = scmp.eq.s32.totalorder %s13, 0
    %p185 = por %p183, %p184
    %p186 = scmp.ne.s32.totalorder %s175, %s178
    %p187 = scmp.eq.s32.totalorder %s18, 1
    %p188 = por %p186, %p187
    %p189 = scmp.ne.s32.totalorder %s178, %s179
    %p190 = scmp.eq.s32.totalorder %s18, 0
    %p191 = por %p189, %p190
    %p192 = scmp.ne.s32.totalorder %s178, %s179
    %p193 = scmp.eq.s32.totalorder %s19, 1
    %p194 = por %p192, %p193
    %p196 = scmp.ne.s32.totalorder %s179, %s195
    %p197 = scmp.eq.s32.totalorder %s19, 0
    %p198 = por %p196, %p197
    %p199 = scmp.le.s32.totalorder 1, %s13
    %p200 = scmp.lt.s32.totalorder %s13, 3
    %p201 = pnand %p199, %p200
    %p202 = pneg %p201
    // Predicated region
    $region9: #{feed_forward.1} parent=5 // pred_check
      _
    $region10: #{feed_forward.1} parent=5 // pred_check_branch
      %204 = sbr.rel (%p201) target = $region12
    $region11: #{feed_forward.1} parent=5 // pred_region
      %s205 = ssub.s32 %s13, 1
      // Predicated region
      $region13: #{feed_forward.1} parent=11 // pred_check
        %p206 = pneg %p60
      $region14: #{feed_forward.1} parent=11 // pred_check_branch
        %208 = sbr.rel (%p206) target = $region16
      $region15: #{feed_forward.1} parent=11 // pred_region
        _
      $region16: #{feed_forward.1} parent=11 // pred_fallthru
        _
      // Predicated region
      $region17: #{feed_forward.1} parent=11 // pred_check
        %p209 = pneg %p81
      $region18: #{feed_forward.1} parent=11 // pred_check_branch
        %211 = sbr.rel (%p209) target = $region20
      $region19: #{feed_forward.1} parent=11 // pred_region
        _
      $region20: #{feed_forward.1} parent=11 // pred_fallthru
        _
      // Predicated region
      $region21: #{feed_forward.1} parent=11 // pred_check
        %p212 = pneg %p102
      $region22: #{feed_forward.1} parent=11 // pred_check_branch
        %214 = sbr.rel (%p212) target = $region24
      $region23: #{feed_forward.1} parent=11 // pred_region
        _
      $region24: #{feed_forward.1} parent=11 // pred_fallthru
        _
      // Predicated region
      $region25: #{feed_forward.1} parent=11 // pred_check
        %p215 = pneg %p123
      $region26: #{feed_forward.1} parent=11 // pred_check_branch
        %217 = sbr.rel (%p215) target = $region28
      $region27: #{feed_forward.1} parent=11 // pred_region
        _
      $region28: #{feed_forward.1} parent=11 // pred_fallthru
        _
      // Predicated region
      $region29: #{feed_forward.1} parent=11 // pred_check
        %p218 = pneg %p144
      $region30: #{feed_forward.1} parent=11 // pred_check_branch
        %220 = sbr.rel (%p218) target = $region32
      $region31: #{feed_forward.1} parent=11 // pred_region
        _
      $region32: #{feed_forward.1} parent=11 // pred_fallthru
        _
      // Predicated region
      $region33: #{feed_forward.1} parent=11 // pred_check
        %p221 = pneg %p165
      $region34: #{feed_forward.1} parent=11 // pred_check_branch
        %223 = sbr.rel (%p221) target = $region36
      $region35: #{feed_forward.1} parent=11 // pred_region
        _
      $region36: #{feed_forward.1} parent=11 // pred_fallthru
        _
    $region12: #{feed_forward.1} parent=5 // pred_fallthru
      _
    %p224 = scmp.lt.s32.totalorder %s13, 2
    // Predicated region
    $region37: #{feed_forward.1} parent=5 // pred_check
      %p225 = pneg %p224
    $region38: #{feed_forward.1} parent=5 // pred_check_branch
      %227 = sbr.rel (%p225) target = $region40
    $region39: #{feed_forward.1} parent=5 // pred_region
      // Predicated region
      $region41: #{feed_forward.1} parent=39 // pred_check
        %p228 = pneg %p33
      $region42: #{feed_forward.1} parent=39 // pred_check_branch
        %230 = sbr.rel (%p228) target = $region44
      $region43: #{feed_forward.1} parent=39 // pred_region
        %p231 = scmp.lt.s32.totalorder %s13, 1
        %s232 = scalar_select %p231, %s13, 1
        %s233 = smul.addr %s232, 8
        %s234 = scalar_lea.vmem %s0, %s233
      $region44: #{feed_forward.1} parent=39 // pred_fallthru
        _
    $region40: #{feed_forward.1} parent=5 // pred_fallthru
      _
    %p235 = scmp.le.s32.totalorder 1, %s13
    %p236 = scmp.lt.s32.totalorder %s13, 3
    %p237 = pnand %p235, %p236
    %p238 = pneg %p237
    // Predicated region
    $region45: #{feed_forward.1} parent=5 // pred_check
      _
    $region46: #{feed_forward.1} parent=5 // pred_check_branch
      %240 = sbr.rel (%p237) target = $region48
    $region47: #{feed_forward.1} parent=5 // pred_region
      %s241 = ssub.s32 %s13, 1
      %p242 = scmp.lt.s32.totalorder %s18, 1
      %s243 = scalar_select %p242, %s18, 1
      %s244 = smul.addr %s243, 8
      %s245 = scalar_lea.vmem %s0, %s244
      %p246 = pneg %p39
      %p247 = pneg %p36
      %p248 = pneg %p60
      %p249 = pneg %p57
      %p250 = pneg %p81
      %p251 = pneg %p78
      %p252 = pneg %p102
      %p253 = pneg %p99
      %p254 = pneg %p123
      %p255 = pneg %p120
      %p256 = pneg %p144
      %p257 = pneg %p141
      %p258 = pneg %p165
      %p259 = pneg %p162
      %p260 = pneg %p191
      %p261 = pneg %p188
      %p262 = scmp.lt.s32.totalorder %s18, 1
      %s263 = scalar_select %p262, %s18, 1
      %s264 = smul.addr %s263, 8
      %s265 = scalar_lea.vmem %s7, %s264
      %p266 = scmp.lt.s32.totalorder %s18, 1
      %s267 = scalar_select %p266, %s18, 1
      %s268 = smul.addr %s267, 8
      %s269 = scalar_lea.vmem %s0, %s268
      %p270 = scmp.lt.s32.totalorder %s18, 1
      %s271 = scalar_select %p270, %s18, 1
      %s272 = smul.addr %s271, 8
      %s273 = scalar_lea.vmem %s7, %s272
      %v274 = vld [vmem:[%s269] sm:$0xff]
      %v275 = vld [vmem:[%s1] sm:$0xff]
      %v276 = vld [vmem:[%s1 + $0x8] sm:$0xff]
      %v277 = vld [vmem:[%s1 + $0x10] sm:$0xff]
      %v278 = vld [vmem:[%s1 + $0x18] sm:$0xff]
      %v279 = vld [vmem:[%s1 + $0x20] sm:$0xff]
      %v280 = vld [vmem:[%s1 + $0x28] sm:$0xff]
      %v281 = vld [vmem:[%s1 + $0x30] sm:$0xff]
      %v282 = vld [vmem:[%s1 + $0x38] sm:$0xff]
      %v283 = vld [vmem:[%s1 + $0x40] sm:$0xff]
      %v284 = vld [vmem:[%s1 + $0x48] sm:$0xff]
      %v285 = vld [vmem:[%s1 + $0x50] sm:$0xff]
      %v286 = vld [vmem:[%s1 + $0x58] sm:$0xff]
      %v287 = vld [vmem:[%s1 + $0x60] sm:$0xff]
      %v288 = vld [vmem:[%s1 + $0x68] sm:$0xff]
      %v289 = vld [vmem:[%s1 + $0x70] sm:$0xff]
      %v290 = vld [vmem:[%s1 + $0x78] sm:$0xff]
      %v291 = vld [vmem:[%s2] sm:$0x1]
      %v293 = vlaneseq
      %v294 = vshrl.u32 %v293, 7
      %v295 = vsub.s32 0, %v294
      %v296 = vrot.slane %v291, %v295
      %298 = vmatprep.subr.mxu0 0.0
      %299 = vmatpush1.msra.mxu0 %v275
      %300 = vmatprep.subr.mxu0 0.0
      %301 = vmatpush1.msra.mxu0 %v276
      %302 = vmatprep.subr.mxu0 0.0
      %303 = vmatpush1.msra.mxu0 %v277
      %304 = vmatprep.subr.mxu0 0.0
      %305 = vmatpush1.msra.mxu0 %v278
      %306 = vmatprep.subr.mxu0 0.0
      %307 = vmatpush1.msra.mxu0 %v279
      %308 = vmatprep.subr.mxu0 0.0
      %309 = vmatpush1.msra.mxu0 %v280
      %310 = vmatprep.subr.mxu0 0.0
      %311 = vmatpush1.msra.mxu0 %v281
      %312 = vmatprep.subr.mxu0 0.0
      %313 = vmatpush1.msra.mxu0 %v282
      %314 = vmatprep.subr.mxu0 0.0
      %315 = vmatpush1.msra.mxu0 %v283
      %316 = vmatprep.subr.mxu0 0.0
      %317 = vmatpush1.msra.mxu0 %v284
      %318 = vmatprep.subr.mxu0 0.0
      %319 = vmatpush1.msra.mxu0 %v285
      %320 = vmatprep.subr.mxu0 0.0
      %321 = vmatpush1.msra.mxu0 %v286
      %322 = vmatprep.subr.mxu0 0.0
      %323 = vmatpush1.msra.mxu0 %v287
      %324 = vmatprep.subr.mxu0 0.0
      %325 = vmatpush1.msra.mxu0 %v288
      %326 = vmatprep.subr.mxu0 0.0
      %327 = vmatpush1.msra.mxu0 %v289
      %328 = vmatprep.subr.mxu0 0.0
      %329 = vmatpush1.msra.mxu0 %v290
      %330 = vmatprep.subr.mxu0 0.0
      %331 = vmatpush1.msra.mxu0 0.0
      %332 = vmatprep.subr.mxu0 0.0
      %333 = vmatpush1.msra.mxu0 0.0
      %334 = vmatprep.subr.mxu0 0.0
      %335 = vmatpush1.msra.mxu0 0.0
      %336 = vmatprep.subr.mxu0 0.0
      %337 = vmatpush1.msra.mxu0 0.0
      %338 = vmatprep.subr.mxu0 0.0
      %339 = vmatpush1.msra.mxu0 0.0
      %340 = vmatprep.subr.mxu0 0.0
      %341 = vmatpush1.msra.mxu0 0.0
      %342 = vmatprep.subr.mxu0 0.0
      %343 = vmatpush1.msra.mxu0 0.0
      %344 = vmatprep.subr.mxu0 0.0
      %345 = vmatpush1.msra.mxu0 0.0
      %346 = vmatprep.subr.mxu0 0.0
      %347 = vmatpush1.msra.mxu0 0.0
      %348 = vmatprep.subr.mxu0 0.0
      %349 = vmatpush1.msra.mxu0 0.0
      %350 = vmatprep.subr.mxu0 0.0
      %351 = vmatpush1.msra.mxu0 0.0
      %352 = vmatprep.subr.mxu0 0.0
      %353 = vmatpush1.msra.mxu0 0.0
      %354 = vmatprep.subr.mxu0 0.0
      %355 = vmatpush1.msra.mxu0 0.0
      %356 = vmatprep.subr.mxu0 0.0
      %357 = vmatpush1.msra.mxu0 0.0
      %358 = vmatprep.subr.mxu0 0.0
      %359 = vmatpush1.msra.mxu0 0.0
      %360 = vmatprep.subr.mxu0 0.0
      %361 = vmatpush1.msra.mxu0 0.0
      %362 = vmatprep.mubr.f32.mxu0 0.0
      %363 = vmatmul.mubr.f32.gmra.mrb[0].mxu0 %v274
      %v364 = vpop.f32.mrb[0].mxu0
      %v365 = vadd.f32 %v296, %v364
      %v366 = vpop.f32.mrb[0].mxu0
      %367 = vdwg.mxu0
      %v368 = vmax.f32 %v365, 0.0
      %v369 = vld [vmem:[%s3] sm:$0xff]
      %v370 = vld [vmem:[%s3 + $0x8] sm:$0xff]
      %v371 = vld [vmem:[%s3 + $0x10] sm:$0xff]
      %v372 = vld [vmem:[%s3 + $0x18] sm:$0xff]
      %v373 = vld [vmem:[%s3 + $0x20] sm:$0xff]
      %v374 = vld [vmem:[%s3 + $0x28] sm:$0xff]
      %v375 = vld [vmem:[%s3 + $0x30] sm:$0xff]
      %v376 = vld [vmem:[%s3 + $0x38] sm:$0xff]
      %v377 = vld [vmem:[%s3 + $0x40] sm:$0xff]
      %v378 = vld [vmem:[%s3 + $0x48] sm:$0xff]
      %v379 = vld [vmem:[%s3 + $0x50] sm:$0xff]
      %v380 = vld [vmem:[%s3 + $0x58] sm:$0xff]
      %v381 = vld [vmem:[%s3 + $0x60] sm:$0xff]
      %v382 = vld [vmem:[%s3 + $0x68] sm:$0xff]
      %v383 = vld [vmem:[%s3 + $0x70] sm:$0xff]
      %v384 = vld [vmem:[%s3 + $0x78] sm:$0xff]
      %385 = vmatprep.subr.mxu0 0.0
      %386 = vmatpush1.msra.mxu0 %v369
      %387 = vmatprep.subr.mxu0 0.0
      %388 = vmatpush1.msra.mxu0 %v370
      %389 = vmatprep.subr.mxu0 0.0
      %390 = vmatpush1.msra.mxu0 %v371
      %391 = vmatprep.subr.mxu0 0.0
      %392 = vmatpush1.msra.mxu0 %v372
      %393 = vmatprep.subr.mxu0 0.0
      %394 = vmatpush1.msra.mxu0 %v373
      %395 = vmatprep.subr.mxu0 0.0
      %396 = vmatpush1.msra.mxu0 %v374
      %397 = vmatprep.subr.mxu0 0.0
      %398 = vmatpush1.msra.mxu0 %v375
      %399 = vmatprep.subr.mxu0 0.0
      %400 = vmatpush1.msra.mxu0 %v376
      %401 = vmatprep.subr.mxu0 0.0
      %402 = vmatpush1.msra.mxu0 %v377
      %403 = vmatprep.subr.mxu0 0.0
      %404 = vmatpush1.msra.mxu0 %v378
      %405 = vmatprep.subr.mxu0 0.0
      %406 = vmatpush1.msra.mxu0 %v379
      %407 = vmatprep.subr.mxu0 0.0
      %408 = vmatpush1.msra.mxu0 %v380
      %409 = vmatprep.subr.mxu0 0.0
      %410 = vmatpush1.msra.mxu0 %v381
      %411 = vmatprep.subr.mxu0 0.0
      %412 = vmatpush1.msra.mxu0 %v382
      %413 = vmatprep.subr.mxu0 0.0
      %414 = vmatpush1.msra.mxu0 %v383
      %415 = vmatprep.subr.mxu0 0.0
      %416 = vmatpush1.msra.mxu0 %v384
      %417 = vmatprep.subr.mxu0 0.0
      %418 = vmatpush1.msra.mxu0 0.0
      %419 = vmatprep.subr.mxu0 0.0
      %420 = vmatpush1.msra.mxu0 0.0
      %421 = vmatprep.subr.mxu0 0.0
      %422 = vmatpush1.msra.mxu0 0.0
      %423 = vmatprep.subr.mxu0 0.0
      %424 = vmatpush1.msra.mxu0 0.0
      %425 = vmatprep.subr.mxu0 0.0
      %426 = vmatpush1.msra.mxu0 0.0
      %427 = vmatprep.subr.mxu0 0.0
      %428 = vmatpush1.msra.mxu0 0.0
      %429 = vmatprep.subr.mxu0 0.0
      %430 = vmatpush1.msra.mxu0 0.0
      %431 = vmatprep.subr.mxu0 0.0
      %432 = vmatpush1.msra.mxu0 0.0
      %433 = vmatprep.subr.mxu0 0.0
      %434 = vmatpush1.msra.mxu0 0.0
      %435 = vmatprep.subr.mxu0 0.0
      %436 = vmatpush1.msra.mxu0 0.0
      %437 = vmatprep.subr.mxu0 0.0
      %438 = vmatpush1.msra.mxu0 0.0
      %439 = vmatprep.subr.mxu0 0.0
      %440 = vmatpush1.msra.mxu0 0.0
      %441 = vmatprep.subr.mxu0 0.0
      %442 = vmatpush1.msra.mxu0 0.0
      %443 = vmatprep.subr.mxu0 0.0
      %444 = vmatpush1.msra.mxu0 0.0
      %445 = vmatprep.subr.mxu0 0.0
      %446 = vmatpush1.msra.mxu0 0.0
      %447 = vmatprep.subr.mxu0 0.0
      %448 = vmatpush1.msra.mxu0 0.0
      %449 = vmatprep.mubr.f32.mxu0 0.0
      %450 = vmatmul.mubr.f32.gmra.mrb[0].mxu0 %v368
      %v451 = vpop.f32.mrb[0].mxu0
      %v452 = vadd.f32 0.0, %v451
      %v453 = vpop.f32.mrb[0].mxu0
      %454 = vdwg.mxu0
      %v455 = vadd.f32 %v274, %v452
      %v456 = vld [vmem:[%s4] sm:$0x1]
      %v458 = vlaneseq
      %v459 = vshrl.u32 %v458, 7
      %v460 = vsub.s32 0, %v459
      %v461 = vrot.slane %v456, %v460
      %v463 = vadd.f32 %v455, %v461
      %v464 = vld [vmem:[%s5] sm:$0x1]
      %v465 = vld [vmem:[%s6] sm:$0x1]
      %466 = vadd.xlane.f32.xlu0 %v463
      %v467 = vpop.xlane.xlu0 %466
      %v468 = vmul.f32 %v467, 0.03125
      %v469 = vsub.f32 %v463, %v468
      %v470 = vlaneseq
      %v471 = vand.u32 %v470, 127
      %vm472 = vcmp.lt.s32.totalorder %v471, 32
      %v473 = vsel %vm472, %v469, 0.0
      %v474 = vmul.f32 %v473, %v473
      %475 = vadd.xlane.f32.xlu0 %v474
      %v476 = vpop.xlane.xlu0 %475
      %v477 = vmul.f32 %v476, 0.03125
      %v478 = vadd.f32 %v477, 1e-05
      %v479 = vrsqrt.pop %v478
      %v480 = vmul.f32 %v469, %v479
      %v482 = vlaneseq
      %v483 = vshrl.u32 %v482, 7
      %v484 = vsub.s32 0, %v483
      %v485 = vrot.slane %v464, %v484
      %v487 = vmul.f32 %v480, %v485
      %v489 = vlaneseq
      %v490 = vshrl.u32 %v489, 7
      %v491 = vsub.s32 0, %v490
      %v492 = vrot.slane %v465, %v491
      %v494 = vadd.f32 %v487, %v492
      %495 = vst [vmem:[%s273] sm:$0xff] %v494
      %p496 = scmp.lt.s32.totalorder %s18, 1
      %s497 = scalar_select %p496, %s18, 1
      %s498 = smul.addr %s497, 8
      %s499 = scalar_lea.vmem %s7, %s498
      // Predicated region
      $region49: #{feed_forward.1} parent=47 // pred_check
        %p500 = pneg %p188
      $region50: #{feed_forward.1} parent=47 // pred_check_branch
        %502 = sbr.rel (%p500) target = $region52
      $region51: #{feed_forward.1} parent=47 // pred_region
        _
      $region52: #{feed_forward.1} parent=47 // pred_fallthru
        _
    $region48: #{feed_forward.1} parent=5 // pred_fallthru
      _
    %p503 = scmp.le.s32.totalorder 2, %s13
    // Predicated region
    $region53: #{feed_forward.1} parent=5 // pred_check
      %p504 = pneg %p503
    $region54: #{feed_forward.1} parent=5 // pred_check_branch
      %506 = sbr.rel (%p504) target = $region56
    $region55: #{feed_forward.1} parent=5 // pred_region
      %s507 = ssub.s32 %s13, 2
      // Predicated region
      $region57: #{feed_forward.1} parent=55 // pred_check
        %p508 = pneg %p194
      $region58: #{feed_forward.1} parent=55 // pred_check_branch
        %510 = sbr.rel (%p508) target = $region60
      $region59: #{feed_forward.1} parent=55 // pred_region
        %p511 = scmp.lt.s32.totalorder %s19, 1
        %s512 = scalar_select %p511, %s19, 1
        %s513 = smul.addr %s512, 8
        %s514 = scalar_lea.vmem %s7, %s513
      $region60: #{feed_forward.1} parent=55 // pred_fallthru
        _
    $region56: #{feed_forward.1} parent=5 // pred_fallthru
      _
  $region6: #{feed_forward.1} parent=0 // loop_footer
    %s17 = sadd.s32 1, %s13
  $region7: #{feed_forward.1} parent=0 // loop_footer_branch
    %12 = sbr.rel target = $region3
  $region8: #{feed_forward.1} parent=0 // loop_exit
    _

</llo_original>
